<compile_context>
chip_gen: v6e
topology: v6e:2x2x1
jax: 0.10.0
libtpu: 0.0.40
codegen_flags: <defaults>
</compile_context>

<pallas_src>
import functools
import math

import jax
import jax.numpy as jnp
from jax.experimental import pallas as pl
from jax.experimental.pallas import tpu as pltpu


def _round_up(x, m):
    return ((x + m - 1) // m) * m


# ---------------------------------------------------------------------------
# Kernel
# ---------------------------------------------------------------------------
def _ff_kernel(x_ref, w1_ref, b1_ref, w2_ref, b2_ref, o_ref, acc_ref):
    # x_ref:  (tm, dim_p)   compute dtype (bf16 default)
    # w1_ref: (dim_p, th)   compute dtype
    # b1_ref: (1, th)       f32
    # w2_ref: (th, dim_p)   compute dtype
    # b2_ref: (1, dim_p)    f32
    # o_ref:  (tm, dim_p)   output dtype
    # acc_ref:(tm, dim_p)   f32 accumulator, resident across the hidden (k) axis
    k = pl.program_id(1)

    @pl.when(k == 0)
    def _():
        acc_ref[...] = jnp.zeros_like(acc_ref)

    # Linear 1 (this hidden tile): MXU matmul, f32 accumulation.
    h = jnp.dot(x_ref[...], w1_ref[...], preferred_element_type=jnp.float32)
    h = h + b1_ref[...]

    # GELU, tanh approximation -> exp/tanh go to the EUP slot, keeping VALU free.
    # TODO(synk): torch.nn.GELU() default is the exact erf form; use
    # 0.5*h*(1+erf(h/sqrt(2))) here if bit-accurate erf numerics are required.
    h = jax.nn.gelu(h, approximate=True)

    # Dropout(p=0.0) == identity (eval mode) -> elided.

    # Linear 2 partial product over this hidden tile, accumulated in f32.
    acc_ref[...] += jnp.dot(h.astype(w2_ref.dtype), w2_ref[...],
                            preferred_element_type=jnp.float32)

    @pl.when(k == pl.num_programs(1) - 1)
    def _():
        o_ref[...] = (acc_ref[...] + b2_ref[...]).astype(o_ref.dtype)


# ---------------------------------------------------------------------------
# Tile planning (static, shape-only)
# ---------------------------------------------------------------------------
def plan_tiles(M, dim, hidden, *, compute_dtype=jnp.bfloat16, out_dtype=jnp.float32,
               tm_max=256, th_max=512, vmem_budget_bytes=48 * 1024 * 1024):
    """Pick (tm, th) so the double-buffered working set fits the VMEM budget."""
    dim_p = _round_up(dim, 128)
    hidden_p = _round_up(hidden, 128)

    tm = min(tm_max, _round_up(M, 8))
    if tm >= M and M > 8:
        # Keep the "parallel" row axis >= 2 steps so both v7x TensorCores get work.
        tm = _round_up((M + 1) // 2, 8)
    th = min(th_max, hidden_p)

    cb = jnp.dtype(compute_dtype).itemsize
    ob = jnp.dtype(out_dtype).itemsize

    def vmem_usage(tm_, th_):
        x_t = tm_ * dim_p * cb
        w1_t = dim_p * th_ * cb
        b1_t = 8 * th_ * 4          # (1, th) pads to 8 sublanes
        w2_t = th_ * dim_p * cb
        b2_t = 8 * dim_p * 4
        o_t = tm_ * dim_p * ob
        acc = tm_ * dim_p * 4       # single-buffered scratch accumulator
        return 2 * (x_t + w1_t + b1_t + w2_t + b2_t + o_t) + acc

    # Shrink the hidden tile first, then the row tile, until we fit the budget.
    while vmem_usage(tm, th) > vmem_budget_bytes and th > 128:
        th = max(128, _round_up(th // 2, 128))
    while vmem_usage(tm, th) > vmem_budget_bytes and tm > 8:
        tm = max(8, _round_up(tm // 2, 8))

    hidden_pp = _round_up(hidden_p, th)
    usage = vmem_usage(tm, th)
    vmem_limit = max(32 * 1024 * 1024, usage + 4 * 1024 * 1024)
    return dict(tm=tm, th=th, dim_p=dim_p, hidden_p=hidden_pp,
                vmem_limit_bytes=int(vmem_limit))


def prepare_params(w1, b1, w2, b2, plan, compute_dtype=jnp.bfloat16):
    """Pad + cast the weights ONCE, outside the jitted hot path."""
    dim, hidden = w1.shape
    dim_p, hidden_p = plan["dim_p"], plan["hidden_p"]
    w1_p = jnp.pad(w1, ((0, dim_p - dim), (0, hidden_p - hidden))).astype(compute_dtype)
    b1_p = jnp.pad(b1.reshape(1, hidden), ((0, 0), (0, hidden_p - hidden))).astype(jnp.float32)
    w2_p = jnp.pad(w2, ((0, hidden_p - hidden), (0, dim_p - dim))).astype(compute_dtype)
    b2_p = jnp.pad(b2.reshape(1, dim), ((0, 0), (0, dim_p - dim))).astype(jnp.float32)
    return w1_p, b1_p, w2_p, b2_p


# ---------------------------------------------------------------------------
# Forward
# ---------------------------------------------------------------------------
@functools.partial(jax.jit,
                   static_argnames=("tm", "th", "vmem_limit_bytes", "compute_dtype"))
def feed_forward_padded(x, w1_p, b1_p, w2_p, b2_p, *, tm, th,
                        vmem_limit_bytes, compute_dtype=jnp.bfloat16):
    """x: (batch, seq, dim) unpadded.  Weights already padded/cast by prepare_params."""
    batch, seq, dim = x.shape
    M = batch * seq
    dim_p = w1_p.shape[0]
    hidden_p = w1_p.shape[1]
    M_p = _round_up(M, tm)

    # Only the (small) activation is padded/cast inside the jitted hot path.
    x2d = jnp.pad(x.reshape(M, dim),
                  ((0, M_p - M), (0, dim_p - dim))).astype(compute_dtype)

    grid = (M_p // tm, hidden_p // th)

    out2d = pl.pallas_call(
        _ff_kernel,
        out_shape=jax.ShapeDtypeStruct((M_p, dim_p), x.dtype),
        grid_spec=pltpu.PrefetchScalarGridSpec(
            num_scalar_prefetch=0,
            grid=grid,
            in_specs=[
                pl.BlockSpec((tm, dim_p), lambda i, k: (i, 0)),    # x rows (resident over k)
                pl.BlockSpec((dim_p, th), lambda i, k: (0, k)),    # W1 hidden tile
                pl.BlockSpec((1, th), lambda i, k: (0, k)),        # b1 hidden tile
                pl.BlockSpec((th, dim_p), lambda i, k: (k, 0)),    # W2 hidden tile
                pl.BlockSpec((1, dim_p), lambda i, k: (0, 0)),     # b2 (small, resident)
            ],
            out_specs=pl.BlockSpec((tm, dim_p), lambda i, k: (i, 0)),
            scratch_shapes=[pltpu.VMEM((tm, dim_p), jnp.float32)],
        ),
        compiler_params=pltpu.CompilerParams(
            dimension_semantics=("parallel", "arbitrary"),
            vmem_limit_bytes=vmem_limit_bytes),
    )(x2d, w1_p, b1_p, w2_p, b2_p)

    return out2d[:M, :dim].reshape(batch, seq, dim)


def feed_forward(x, w1, b1, w2, b2, *, compute_dtype=jnp.bfloat16,
                 tm_max=256, th_max=512, vmem_budget_bytes=48 * 1024 * 1024):
    """Convenience wrapper: plan + pad once + run. Prefer prepare_params + the
    padded entry point when calling repeatedly with the same weights."""
    batch, seq, dim = x.shape
    hidden = w1.shape[1]
    plan = plan_tiles(batch * seq, dim, hidden, compute_dtype=compute_dtype,
                      out_dtype=x.dtype, tm_max=tm_max, th_max=th_max,
                      vmem_budget_bytes=vmem_budget_bytes)
    params = prepare_params(w1, b1, w2, b2, plan, compute_dtype)
    return feed_forward_padded(x, *params, tm=plan["tm"], th=plan["th"],
                               vmem_limit_bytes=plan["vmem_limit_bytes"],
                               compute_dtype=compute_dtype)


# ---------------------------------------------------------------------------
# Init + reference
# ---------------------------------------------------------------------------
def init_params(key, dim, hidden_dim, dtype=jnp.float32):
    """Deterministic init mimicking torch.nn.Linear default (uniform +/- 1/sqrt(fan_in))."""
    k1, k2, k3, k4 = jax.random.split(key, 4)
    bound1 = 1.0 / math.sqrt(dim)
    bound2 = 1.0 / math.sqrt(hidden_dim)
    # Stored already transposed (in_features, out_features) for x @ W.
    w1 = jax.random.uniform(k1, (dim, hidden_dim), dtype, -bound1, bound1)
    b1 = jax.random.uniform(k2, (hidden_dim,), dtype, -bound1, bound1)
    w2 = jax.random.uniform(k3, (hidden_dim, dim), dtype, -bound2, bound2)
    b2 = jax.random.uniform(k4, (dim,), dtype, -bound2, bound2)
    return w1, b1, w2, b2


def _reference(x, w1, b1, w2, b2):
    """Full-f32 reference with exact (erf) GELU, matching torch numerics."""
    h = x @ w1 + b1
    h = 0.5 * h * (1.0 + jax.lax.erf(h / jnp.sqrt(2.0)))
    return h @ w2 + b2


if __name__ == "__main__":
    batch, seq, dim, hidden = 2, 8, 32, 64
    key = jax.random.PRNGKey(0)
    kx, kp = jax.random.split(key)
    x = jax.random.normal(kx, (batch, seq, dim), jnp.float32)
    w1, b1, w2, b2 = init_params(kp, dim, hidden)

    # Plan tiles and pad/cast the weights once, outside the hot path.
    plan = plan_tiles(batch * seq, dim, hidden, compute_dtype=jnp.bfloat16,
                      out_dtype=x.dtype)
    w1_p, b1_p, w2_p, b2_p = prepare_params(w1, b1, w2, b2, plan, jnp.bfloat16)

    out = feed_forward_padded(x, w1_p, b1_p, w2_p, b2_p,
                              tm=plan["tm"], th=plan["th"],
                              vmem_limit_bytes=plan["vmem_limit_bytes"],
                              compute_dtype=jnp.bfloat16)
    out = jax.block_until_ready(out)

    ref = _reference(x, w1, b1, w2, b2)
    assert out.shape == (batch, seq, dim)
    # bf16 MXU operands + tanh GELU vs. full-f32 erf reference -> loosened tolerance.
    assert jnp.allclose(out, ref, atol=5e-2, rtol=5e-2), "mismatch vs reference"

    print("KERNEL_OK")
</pallas_src>

<mosaic_0001>
module attributes {stable_mosaic.version = 11 : i64} {
  func.func @_ff_kernel(%arg0: i32, %arg1: i32, %arg2: memref<8x128xbf16, #tpu.memory_space<vmem>>, %arg3: memref<128x128xbf16, #tpu.memory_space<vmem>>, %arg4: memref<1x128xf32, #tpu.memory_space<vmem>>, %arg5: memref<128x128xbf16, #tpu.memory_space<vmem>>, %arg6: memref<1x128xf32, #tpu.memory_space<vmem>>, %arg7: memref<8x128xf32, #tpu.memory_space<vmem>>, %arg8: memref<8x128xf32, #tpu.memory_space<vmem>>) attributes {dimension_semantics = [#tpu.dimension_semantics<parallel>, #tpu.dimension_semantics<arbitrary>], iteration_bounds = array<i64: 2, 1>, scalar_prefetch = 0 : i64, scratch_operands = 1 : i64, tpu.core_type = #tpu.core_type<tc>, window_params = [{transform_indices = @transform_0, window_bounds = array<i64: 8, 128>}, {transform_indices = @transform_1, window_bounds = array<i64: 128, 128>}, {transform_indices = @transform_2, window_bounds = array<i64: 1, 128>}, {transform_indices = @transform_3, window_bounds = array<i64: 128, 128>}, {pipeline_mode = #tpu.pipeline_mode<synchronous>, transform_indices = @transform_4, window_bounds = array<i64: 1, 128>}, {transform_indices = @transform_5, window_bounds = array<i64: 8, 128>}]} {
    %c0_i32 = arith.constant 0 : i32
    %0 = arith.cmpi eq, %arg1, %c0_i32 : i32
    %1 = arith.extui %0 : i1 to i32
    %c0_i32_0 = arith.constant 0 : i32
    %2 = arith.cmpi ne, %1, %c0_i32_0 : i32
    scf.if %2 {
      %cst_19 = arith.constant 0.000000e+00 : f32
      %31 = vector.broadcast %cst_19 : f32 to vector<8x128xf32>
      %c0_20 = arith.constant 0 : index
      %c0_21 = arith.constant 0 : index
      %32 = vector.load %arg8[%c0_20, %c0_21] : memref<8x128xf32, #tpu.memory_space<vmem>>, vector<8x128xf32>
      tpu.vector_store %arg8[%c0_20, %c0_21], %31 {strides = array<i32>} : memref<8x128xf32, #tpu.memory_space<vmem>>, vector<8x128xf32>,
    } else {
    }
    %c0 = arith.constant 0 : index
    %c0_1 = arith.constant 0 : index
    %3 = vector.load %arg2[%c0, %c0_1] : memref<8x128xbf16, #tpu.memory_space<vmem>>, vector<8x128xbf16>
    %c0_2 = arith.constant 0 : index
    %c0_3 = arith.constant 0 : index
    %4 = vector.load %arg3[%c0_2, %c0_3] : memref<128x128xbf16, #tpu.memory_space<vmem>>, vector<128x128xbf16>
    %cst = arith.constant dense<0.000000e+00> : vector<8x128xf32>
    %5 = tpu.matmul %3, %4, %cst {dimension_numbers = #tpu.dot_dimension_numbers<[1], [0], [0], [1], [0, 0, 1, 1], [], []>} : vector<8x128xbf16>, vector<128x128xbf16>, vector<8x128xf32> -> vector<8x128xf32>
    %c0_4 = arith.constant 0 : index
    %c0_5 = arith.constant 0 : index
    %6 = vector.load %arg4[%c0_4, %c0_5] : memref<1x128xf32, #tpu.memory_space<vmem>>, vector<1x128xf32>
    %7 = vector.broadcast %6 : vector<1x128xf32> to vector<8x128xf32>
    %8 = arith.addf %5, %7 : vector<8x128xf32>
    %9 = arith.mulf %8, %8 : vector<8x128xf32>
    %10 = arith.mulf %8, %9 : vector<8x128xf32>
    %cst_6 = arith.constant 4.471500e-02 : f32
    %11 = vector.broadcast %cst_6 : f32 to vector<8x128xf32>
    %12 = arith.mulf %11, %10 : vector<8x128xf32>
    %13 = arith.addf %8, %12 : vector<8x128xf32>
    %cst_7 = arith.constant 0.797884583 : f32
    %14 = vector.broadcast %cst_7 : f32 to vector<8x128xf32>
    %15 = arith.mulf %14, %13 : vector<8x128xf32>
    %16 = math.tanh %15 : vector<8x128xf32>
    %cst_8 = arith.constant 1.000000e+00 : f32
    %17 = vector.broadcast %cst_8 : f32 to vector<8x128xf32>
    %18 = arith.addf %17, %16 : vector<8x128xf32>
    %cst_9 = arith.constant 5.000000e-01 : f32
    %19 = vector.broadcast %cst_9 : f32 to vector<8x128xf32>
    %20 = arith.mulf %19, %18 : vector<8x128xf32>
    %21 = arith.mulf %8, %20 : vector<8x128xf32>
    %c0_10 = arith.constant 0 : index
    %c0_11 = arith.constant 0 : index
    %22 = vector.load %arg8[%c0_10, %c0_11] : memref<8x128xf32, #tpu.memory_space<vmem>>, vector<8x128xf32>
    %23 = arith.truncf %21 : vector<8x128xf32> to vector<8x128xbf16>
    %c0_12 = arith.constant 0 : index
    %c0_13 = arith.constant 0 : index
    %24 = vector.load %arg5[%c0_12, %c0_13] : memref<128x128xbf16, #tpu.memory_space<vmem>>, vector<128x128xbf16>
    %cst_14 = arith.constant dense<0.000000e+00> : vector<8x128xf32>
    %25 = tpu.matmul %23, %24, %cst_14 {dimension_numbers = #tpu.dot_dimension_numbers<[1], [0], [0], [1], [0, 0, 1, 1], [], []>} : vector<8x128xbf16>, vector<128x128xbf16>, vector<8x128xf32> -> vector<8x128xf32>
    %26 = arith.addf %22, %25 : vector<8x128xf32>
    %c0_15 = arith.constant 0 : index
    %c0_16 = arith.constant 0 : index
    %27 = vector.load %arg8[%c0_15, %c0_16] : memref<8x128xf32, #tpu.memory_space<vmem>>, vector<8x128xf32>
    tpu.vector_store %arg8[%c0_15, %c0_16], %26 {strides = array<i32>} : memref<8x128xf32, #tpu.memory_space<vmem>>, vector<8x128xf32>,
    %c0_i32_17 = arith.constant 0 : i32
    %28 = arith.cmpi eq, %arg1, %c0_i32_17 : i32
    %29 = arith.extui %28 : i1 to i32
    %c0_i32_18 = arith.constant 0 : i32
    %30 = arith.cmpi ne, %29, %c0_i32_18 : i32
    scf.if %30 {
      %c0_19 = arith.constant 0 : index
      %c0_20 = arith.constant 0 : index
      %31 = vector.load %arg8[%c0_19, %c0_20] : memref<8x128xf32, #tpu.memory_space<vmem>>, vector<8x128xf32>
      %c0_21 = arith.constant 0 : index
      %c0_22 = arith.constant 0 : index
      %32 = vector.load %arg6[%c0_21, %c0_22] : memref<1x128xf32, #tpu.memory_space<vmem>>, vector<1x128xf32>
      %33 = vector.broadcast %32 : vector<1x128xf32> to vector<8x128xf32>
      %34 = arith.addf %31, %33 : vector<8x128xf32>
      %c0_23 = arith.constant 0 : index
      %c0_24 = arith.constant 0 : index
      %35 = vector.load %arg7[%c0_23, %c0_24] : memref<8x128xf32, #tpu.memory_space<vmem>>, vector<8x128xf32>
      tpu.vector_store %arg7[%c0_23, %c0_24], %34 {strides = array<i32>} : memref<8x128xf32, #tpu.memory_space<vmem>>, vector<8x128xf32>,
    } else {
    }
    return
  }
  func.func @transform_0(%arg0: i32, %arg1: i32) -> (i32, i32) {
    %c0_i32 = arith.constant 0 : i32
    %c0_i32_0 = arith.constant 0 : i32
    return %arg0, %c0_i32 : i32, i32
  }
  func.func @transform_1(%arg0: i32, %arg1: i32) -> (i32, i32) {
    %c0_i32 = arith.constant 0 : i32
    %c0_i32_0 = arith.constant 0 : i32
    return %c0_i32, %arg1 : i32, i32
  }
  func.func @transform_2(%arg0: i32, %arg1: i32) -> (i32, i32) {
    %c0_i32 = arith.constant 0 : i32
    %c0_i32_0 = arith.constant 0 : i32
    return %c0_i32, %arg1 : i32, i32
  }
  func.func @transform_3(%arg0: i32, %arg1: i32) -> (i32, i32) {
    %c0_i32 = arith.constant 0 : i32
    %c0_i32_0 = arith.constant 0 : i32
    return %arg1, %c0_i32 : i32, i32
  }
  func.func @transform_4(%arg0: i32, %arg1: i32) -> (i32, i32) {
    %c0_i32 = arith.constant 0 : i32
    %c0_i32_0 = arith.constant 0 : i32
    %c0_i32_1 = arith.constant 0 : i32
    return %c0_i32, %c0_i32_0 : i32, i32
  }
  func.func @transform_5(%arg0: i32, %arg1: i32) -> (i32, i32) {
    %c0_i32 = arith.constant 0 : i32
    %c0_i32_0 = arith.constant 0 : i32
    return %arg0, %c0_i32 : i32, i32
  }
}

</mosaic_0001>

<llo_original>
// kernel: feed_forward_padded.1
$region0: #{feed_forward_padded.1}
  #allocation0 [shape = 'u32[]', space=smem, size = 0x4, offset = 0x4, fixed_abs, tag = 'smem constant byte address 0x4 - core index']
  #allocation1 [shape = 'u32[144,128]{1,0:T(1,128)}', space=vmem, size = 0x12000, scoped, tag = 'internal scratch']
  #allocation2 [shape = 'f32[8,128]{1,0:T(8,128)}', space=vmem, size = 0x1000, scoped, tag = 'scratch operand']
  %s0 = inlined_call_operand.vmem [shape: bf16[16,128], index: 0, kind: input, shape index: {}]
  %s1 = inlined_call_operand.hbm [shape: bf16[128,128], index: 1, kind: input, shape index: {}]
  %s2 = inlined_call_operand.vmem [shape: f32[1,128], index: 2, kind: input, shape index: {}]
  %s3 = inlined_call_operand.hbm [shape: bf16[128,128], index: 3, kind: input, shape index: {}]
  %s4 = inlined_call_operand.vmem [shape: f32[1,128], index: 4, kind: input, shape index: {}]
  %s5 = inlined_call_operand.vmem [shape: f32[16,128], index: 5, kind: output, shape index: {}]
  %s6 = sld [smem:[#allocation0]]
  $region69: #{feed_forward_padded.1} parent=0
    _
  %s8 = ssub.s32 1, %s6
  %s9 = scalar_select 0, %s8, %s6
  $region1: #{feed_forward_padded.1} parent=0
    #allocation3 [shape = 'u8[32768]{0}', space=vmem, size = 0x8000, scoped, tag = 'input window, operand 1, single buffered']
    #allocation4 [shape = 's32[2]{0}', space=sflag, size = 0x8, scoped, tag = 'scoped memory for feed_forward_padded.1']
    #allocation5 [shape = 'u8[32768]{0}', space=vmem, size = 0x8000, scoped, tag = 'input window, operand 3, single buffered']
    #allocation6 [shape = 's32[1]{0}', space=sflag, size = 0x4, scoped, tag = 'scoped memory for feed_forward_padded.1']
    %10 = vsyncpa [#allocation4], 0
    %11 = vsyncpa [#allocation6], 0
    loop: start=0, step=1, limit=4
    $region2: #{feed_forward_padded.1} parent=1 // loop_pre_header
      _
    $region3: #{feed_forward_padded.1} parent=1 // loop_header
      %s13 = sphi 0, %s17
      %p14 = scmp.ge.s32.totalorder %s13, 4
      %s20 = sphi 0, %s32
      %s21 = sphi 0, %s28
      %s22 = sphi 0, %s20
      %s23 = sphi 0, %s21
      %s24 = sphi 0, %s22
      %s25 = sphi 0, %s23
      %s35 = sphi 0, %s37
      %s38 = sphi 0, %s35
      %s39 = sphi 0, %s38
      %s55 = sphi 0, %s39
      %s61 = sphi 0, %s63
      %s64 = sphi 0, %s61
      %s65 = sphi 0, %s64
      %s81 = sphi 0, %s65
      %s87 = sphi 0, %s89
      %s90 = sphi 0, %s87
      %s91 = sphi 0, %s90
      %s107 = sphi 0, %s91
      %s113 = sphi 0, %s115
      %s116 = sphi 0, %s113
      %s117 = sphi 0, %s116
      %s133 = sphi 0, %s117
      %s137 = sphi 0, %s137
      %s139 = sphi 0, %s137
      %s140 = sphi 0, %s139
      %s154 = sphi 0, %s140
      %s160 = sphi 0, %s162
      %s163 = sphi 0, %s160
      %s164 = sphi 0, %s163
      %s180 = sphi 0, %s164
    $region4: #{feed_forward_padded.1} parent=1 // loop_header_branch
      %16 = sbr.rel (%p14) target = $region8
    $region5: #{feed_forward_padded.1} parent=1 // loop_body
      %s18 = ssub.s32 %s13, 1
      %s19 = ssub.s32 %s13, 2
      %s26 = sadd.s32 1, %s21
      %p27 = scmp.ge.s32.totalorder %s26, 1
      %s28 = scalar_select %p27, 0, %s26
      %s29 = sadd.s32 1, %s20
      %s30 = scalar_select %p27, %s29, %s20
      %p31 = scmp.ge.s32.totalorder %s30, 2
      %s32 = scalar_select %p31, 0, %s30
      %s33 = ssub.s32 %s20, %s32
      %p34 = scmp.eq.s32.totalorder %s33, 0
      %s36 = sadd.s32 %s35, 1
      %s37 = scalar_select %p34, %s35, %s36
      %p40 = pneg %p34
      %p41 = scmp.eq.s32.totalorder %s13, 1
      %p42 = por %p40, %p41
      %p43 = scmp.ne.s32.totalorder %s35, %s38
      %p44 = scmp.eq.s32.totalorder %s13, 0
      %p45 = por %p43, %p44
      %p46 = scmp.ne.s32.totalorder %s35, %s38
      %p47 = scmp.eq.s32.totalorder %s18, 1
      %p48 = por %p46, %p47
      %p49 = scmp.ne.s32.totalorder %s38, %s39
      %p50 = scmp.eq.s32.totalorder %s18, 0
      %p51 = por %p49, %p50
      %p52 = scmp.ne.s32.totalorder %s38, %s39
      %p53 = scmp.eq.s32.totalorder %s19, 1
      %p54 = por %p52, %p53
      %p56 = scmp.ne.s32.totalorder %s39, %s55
      %p57 = scmp.eq.s32.totalorder %s19, 0
      %p58 = por %p56, %p57
      %s59 = ssub.s32 %s21, %s28
      %p60 = scmp.eq.s32.totalorder %s59, 0
      %s62 = sadd.s32 %s61, 1
      %s63 = scalar_select %p60, %s61, %s62
      %p66 = pneg %p60
      %p67 = scmp.eq.s32.totalorder %s13, 1
      %p68 = por %p66, %p67
      %p69 = scmp.ne.s32.totalorder %s61, %s64
      %p70 = scmp.eq.s32.totalorder %s13, 0
      %p71 = por %p69, %p70
      %p72 = scmp.ne.s32.totalorder %s61, %s64
      %p73 = scmp.eq.s32.totalorder %s18, 1
      %p74 = por %p72, %p73
      %p75 = scmp.ne.s32.totalorder %s64, %s65
      %p76 = scmp.eq.s32.totalorder %s18, 0
      %p77 = por %p75, %p76
      %p78 = scmp.ne.s32.totalorder %s64, %s65
      %p79 = scmp.eq.s32.totalorder %s19, 1
      %p80 = por %p78, %p79
      %p82 = scmp.ne.s32.totalorder %s65, %s81
      %p83 = scmp.eq.s32.totalorder %s19, 0
      %p84 = por %p82, %p83
      %s85 = ssub.s32 %s21, %s28
      %p86 = scmp.eq.s32.totalorder %s85, 0
      %s88 = sadd.s32 %s87, 1
      %s89 = scalar_select %p86, %s87, %s88
      %p92 = pneg %p86
      %p93 = scmp.eq.s32.totalorder %s13, 1
      %p94 = por %p92, %p93
      %p95 = scmp.ne.s32.totalorder %s87, %s90
      %p96 = scmp.eq.s32.totalorder %s13, 0
      %p97 = por %p95, %p96
      %p98 = scmp.ne.s32.totalorder %s87, %s90
      %p99 = scmp.eq.s32.totalorder %s18, 1
      %p100 = por %p98, %p99
      %p101 = scmp.ne.s32.totalorder %s90, %s91
      %p102 = scmp.eq.s32.totalorder %s18, 0
      %p103 = por %p101, %p102
      %p104 = scmp.ne.s32.totalorder %s90, %s91
      %p105 = scmp.eq.s32.totalorder %s19, 1
      %p106 = por %p104, %p105
      %p108 = scmp.ne.s32.totalorder %s91, %s107
      %p109 = scmp.eq.s32.totalorder %s19, 0
      %p110 = por %p108, %p109
      %s111 = ssub.s32 %s21, %s28
      %p112 = scmp.eq.s32.totalorder %s111, 0
      %s114 = sadd.s32 %s113, 1
      %s115 = scalar_select %p112, %s113, %s114
      %p118 = pneg %p112
      %p119 = scmp.eq.s32.totalorder %s13, 1
      %p120 = por %p118, %p119
      %p121 = scmp.ne.s32.totalorder %s113, %s116
      %p122 = scmp.eq.s32.totalorder %s13, 0
      %p123 = por %p121, %p122
      %p124 = scmp.ne.s32.totalorder %s113, %s116
      %p125 = scmp.eq.s32.totalorder %s18, 1
      %p126 = por %p124, %p125
      %p127 = scmp.ne.s32.totalorder %s116, %s117
      %p128 = scmp.eq.s32.totalorder %s18, 0
      %p129 = por %p127, %p128
      %p130 = scmp.ne.s32.totalorder %s116, %s117
      %p131 = scmp.eq.s32.totalorder %s19, 1
      %p132 = por %p130, %p131
      %p134 = scmp.ne.s32.totalorder %s117, %s133
      %p135 = scmp.eq.s32.totalorder %s19, 0
      %p136 = por %p134, %p135
      %s138 = sadd.s32 %s137, 1
      %p141 = scmp.eq.s32.totalorder %s13, 1
      %p142 = scmp.ne.s32.totalorder %s137, %s139
      %p143 = scmp.eq.s32.totalorder %s13, 0
      %p144 = por %p142, %p143
      %p145 = scmp.ne.s32.totalorder %s137, %s139
      %p146 = scmp.eq.s32.totalorder %s18, 1
      %p147 = por %p145, %p146
      %p148 = scmp.ne.s32.totalorder %s139, %s140
      %p149 = scmp.eq.s32.totalorder %s18, 0
      %p150 = por %p148, %p149
      %p151 = scmp.ne.s32.totalorder %s139, %s140
      %p152 = scmp.eq.s32.totalorder %s19, 1
      %p153 = por %p151, %p152
      %p155 = scmp.ne.s32.totalorder %s140, %s154
      %p156 = scmp.eq.s32.totalorder %s19, 0
      %p157 = por %p155, %p156
      %s158 = ssub.s32 %s20, %s32
      %p159 = scmp.eq.s32.totalorder %s158, 0
      %s161 = sadd.s32 %s160, 1
      %s162 = scalar_select %p159, %s160, %s161
      %p165 = pneg %p159
      %p166 = scmp.eq.s32.totalorder %s13, 1
      %p167 = por %p165, %p166
      %p168 = scmp.ne.s32.totalorder %s160, %s163
      %p169 = scmp.eq.s32.totalorder %s13, 0
      %p170 = por %p168, %p169
      %p171 = scmp.ne.s32.totalorder %s160, %s163
      %p172 = scmp.eq.s32.totalorder %s18, 1
      %p173 = por %p171, %p172
      %p174 = scmp.ne.s32.totalorder %s163, %s164
      %p175 = scmp.eq.s32.totalorder %s18, 0
      %p176 = por %p174, %p175
      %p177 = scmp.ne.s32.totalorder %s163, %s164
      %p178 = scmp.eq.s32.totalorder %s19, 1
      %p179 = por %p177, %p178
      %p181 = scmp.ne.s32.totalorder %s164, %s180
      %p182 = scmp.eq.s32.totalorder %s19, 0
      %p183 = por %p181, %p182
      %p184 = scmp.le.s32.totalorder 1, %s13
      %p185 = scmp.lt.s32.totalorder %s13, 3
      %p186 = pnand %p184, %p185
      %p187 = pneg %p186
      // Predicated region
      $region9: #{feed_forward_padded.1} parent=5 // pred_check
        _
      $region10: #{feed_forward_padded.1} parent=5 // pred_check_branch
        %189 = sbr.rel (%p186) target = $region12
      $region11: #{feed_forward_padded.1} parent=5 // pred_region
        %s190 = ssub.s32 %s13, 1
        // Predicated region
        $region13: #{feed_forward_padded.1} parent=11 // pred_check
          %p191 = pneg %p77
        $region14: #{feed_forward_padded.1} parent=11 // pred_check_branch
          %193 = sbr.rel (%p191) target = $region16
        $region15: #{feed_forward_padded.1} parent=11 // pred_region
          %s195 = ssub.s32 1024, 1024
          %196 = vsyncadd [#allocation4], %s195
          %s197 = smul.addr %s23, 64
          %s198 = scalar_lea.hbm %s1, %s197
          %s199 = sshll.u32 [#allocation3], 4
          %s200 = int_to_ptr.vmem [resolvable:$true] %s199
          %205 = dma.hbm_to_vmem [thread:$0]  %s198, 1024, %s200, [#allocation4], 64, 64, 4
        $region16: #{feed_forward_padded.1} parent=11 // pred_fallthru
          _
        // Predicated region
        $region17: #{feed_forward_padded.1} parent=11 // pred_check
          %p206 = pneg %p103
        $region18: #{feed_forward_padded.1} parent=11 // pred_check_branch
          %208 = sbr.rel (%p206) target = $region20
        $region19: #{feed_forward_padded.1} parent=11 // pred_region
          %p209 = scmp.lt.s32.totalorder %s23, 0
          %s210 = scalar_select %p209, %s23, 0
          %s211 = scalar_lea.vmem %s2, %s210
        $region20: #{feed_forward_padded.1} parent=11 // pred_fallthru
          _
        // Predicated region
        $region21: #{feed_forward_padded.1} parent=11 // pred_check
          %p212 = pneg %p129
        $region22: #{feed_forward_padded.1} parent=11 // pred_check_branch
          %214 = sbr.rel (%p212) target = $region24
        $region23: #{feed_forward_padded.1} parent=11 // pred_region
          %s215 = smul.u32 16, %s23
          %s217 = ssub.s32 1024, 1024
          %218 = vsyncadd [#allocation6], %s217
          %s219 = smul.addr %s215, 64
          %s220 = scalar_lea.hbm %s3, %s219
          %s221 = sshll.u32 [#allocation5], 4
          %s222 = int_to_ptr.vmem [resolvable:$true] %s221
          %227 = dma.hbm_to_vmem [thread:$0]  %s220, 1024, %s222, [#allocation6], 64, 64, 4
        $region24: #{feed_forward_padded.1} parent=11 // pred_fallthru
          _
        // Predicated region
        $region25: #{feed_forward_padded.1} parent=11 // pred_check
          %p228 = pneg %p150
        $region26: #{feed_forward_padded.1} parent=11 // pred_check_branch
          %230 = sbr.rel (%p228) target = $region28
        $region27: #{feed_forward_padded.1} parent=11 // pred_region
          _
        $region28: #{feed_forward_padded.1} parent=11 // pred_fallthru
          _
      $region12: #{feed_forward_padded.1} parent=5 // pred_fallthru
        _
      %p231 = scmp.lt.s32.totalorder %s13, 2
      // Predicated region
      $region29: #{feed_forward_padded.1} parent=5 // pred_check
        %p232 = pneg %p231
      $region30: #{feed_forward_padded.1} parent=5 // pred_check_branch
        %234 = sbr.rel (%p232) target = $region32
      $region31: #{feed_forward_padded.1} parent=5 // pred_region
        // Predicated region
        $region33: #{feed_forward_padded.1} parent=31 // pred_check
          %p235 = pneg %p45
        $region34: #{feed_forward_padded.1} parent=31 // pred_check_branch
          %237 = sbr.rel (%p235) target = $region36
        $region35: #{feed_forward_padded.1} parent=31 // pred_region
          %p238 = scmp.lt.s32.totalorder %s20, 1
          %s239 = scalar_select %p238, %s20, 1
          %s240 = smul.addr %s239, 4
          %s241 = scalar_lea.vmem %s0, %s240
        $region36: #{feed_forward_padded.1} parent=31 // pred_fallthru
          _
      $region32: #{feed_forward_padded.1} parent=5 // pred_fallthru
        _
      %p242 = scmp.le.s32.totalorder 1, %s13
      %p243 = scmp.lt.s32.totalorder %s13, 3
      %p244 = pnand %p242, %p243
      %p245 = pneg %p244
      // Predicated region
      $region37: #{feed_forward_padded.1} parent=5 // pred_check
        _
      $region38: #{feed_forward_padded.1} parent=5 // pred_check_branch
        %247 = sbr.rel (%p244) target = $region40
      $region39: #{feed_forward_padded.1} parent=5 // pred_region
        %s248 = ssub.s32 %s13, 1
        // Predicated region
        $region41: #{feed_forward_padded.1} parent=39 // pred_check
          %p249 = pneg %p77
        $region42: #{feed_forward_padded.1} parent=39 // pred_check_branch
          %251 = sbr.rel (%p249) target = $region44
        $region43: #{feed_forward_padded.1} parent=39 // pred_region
          %252 = dma.done [#allocation4], 1024
        $region44: #{feed_forward_padded.1} parent=39 // pred_fallthru
          _
        // Predicated region
        $region45: #{feed_forward_padded.1} parent=39 // pred_check
          %p253 = pneg %p129
        $region46: #{feed_forward_padded.1} parent=39 // pred_check_branch
          %255 = sbr.rel (%p253) target = $region48
        $region47: #{feed_forward_padded.1} parent=39 // pred_region
          %256 = dma.done [#allocation6], 1024
        $region48: #{feed_forward_padded.1} parent=39 // pred_fallthru
          _
        %p257 = scmp.lt.s32.totalorder %s22, 1
        %s258 = scalar_select %p257, %s22, 1
        %s259 = smul.addr %s258, 4
        %s260 = scalar_lea.vmem %s0, %s259
        %p261 = pneg %p51
        %p262 = pneg %p48
        %p263 = pneg %p77
        %p264 = pneg %p74
        %p265 = scmp.lt.s32.totalorder %s23, 0
        %s266 = scalar_select %p265, %s23, 0
        %s267 = scalar_lea.vmem %s2, %s266
        %p268 = pneg %p103
        %p269 = pneg %p100
        %p270 = pneg %p129
        %p271 = pneg %p126
        %p272 = pneg %p150
        %p273 = pneg %p147
        %p274 = pneg %p176
        %p275 = pneg %p173
        %p276 = scmp.lt.s32.totalorder %s22, 1
        %s277 = scalar_select %p276, %s22, 1
        %s278 = smul.addr %s277, 8
        %s279 = scalar_lea.vmem %s5, %s278
        %p280 = scmp.lt.s32.totalorder %s22, 1
        %s281 = scalar_select %p280, %s22, 1
        %s282 = smul.addr %s281, 4
        %s283 = scalar_lea.vmem %s0, %s282
        %p284 = scmp.lt.s32.totalorder %s23, 0
        %s285 = scalar_select %p284, %s23, 0
        %s286 = scalar_lea.vmem %s2, %s285
        %s287 = smul.u32 16, %s23
        %p288 = scmp.lt.s32.totalorder %s22, 1
        %s289 = scalar_select %p288, %s22, 1
        %s290 = smul.addr %s289, 8
        %s291 = scalar_lea.vmem %s5, %s290
        %p293 = scmp.eq.s32.totalorder %s23, 0
        // Predicated region
        $region49: #{feed_forward_padded.1} parent=39 // pred_check
          %p294 = pneg %p293
        $region50: #{feed_forward_padded.1} parent=39 // pred_check_branch
          %296 = sbr.rel (%p294) target = $region52
        $region51: #{feed_forward_padded.1} parent=39 // pred_region
          %297 = vst [vmem:[#allocation2] sm:$0xff] 0.0
        $region52: #{feed_forward_padded.1} parent=39 // pred_fallthru
          _
        %v298 = vld [vmem:[%s283] sm:$0xf]
        %v299 = vld [vmem:[#allocation3] sm:$0xf]
        %v300 = vld [vmem:[#allocation3 + $0x4] sm:$0xf]
        %v301 = vld [vmem:[#allocation3 + $0x8] sm:$0xf]
        %v302 = vld [vmem:[#allocation3 + $0xc] sm:$0xf]
        %v303 = vld [vmem:[#allocation3 + $0x10] sm:$0xf]
        %v304 = vld [vmem:[#allocation3 + $0x14] sm:$0xf]
        %v305 = vld [vmem:[#allocation3 + $0x18] sm:$0xf]
        %v306 = vld [vmem:[#allocation3 + $0x1c] sm:$0xf]
        %v307 = vld [vmem:[#allocation3 + $0x20] sm:$0xf]
        %v308 = vld [vmem:[#allocation3 + $0x24] sm:$0xf]
        %v309 = vld [vmem:[#allocation3 + $0x28] sm:$0xf]
        %v310 = vld [vmem:[#allocation3 + $0x2c] sm:$0xf]
        %v311 = vld [vmem:[#allocation3 + $0x30] sm:$0xf]
        %v312 = vld [vmem:[#allocation3 + $0x34] sm:$0xf]
        %v313 = vld [vmem:[#allocation3 + $0x38] sm:$0xf]
        %v314 = vld [vmem:[#allocation3 + $0x3c] sm:$0xf]
        %v315 = vld [vmem:[%s286] sm:$0x1]
        %v317 = vlaneseq
        %v318 = vshrl.u32 %v317, 7
        %v319 = vsub.s32 0, %v318
        %v320 = vrot.slane %v315, %v319
        %v338 = vunpack.c.l.b16 %v299
        %v339 = vunpack.c.l.b16 %v300
        %v340 = vunpack.c.l.b16 %v301
        %v341 = vunpack.c.l.b16 %v302
        %v342 = vunpack.c.l.b16 %v303
        %v343 = vunpack.c.l.b16 %v304
        %v344 = vunpack.c.l.b16 %v305
        %v345 = vunpack.c.l.b16 %v306
        %v346 = vunpack.c.l.b16 %v307
        %v347 = vunpack.c.l.b16 %v308
        %v348 = vunpack.c.l.b16 %v309
        %v349 = vunpack.c.l.b16 %v310
        %v350 = vunpack.c.l.b16 %v311
        %v351 = vunpack.c.l.b16 %v312
        %v352 = vunpack.c.l.b16 %v313
        %v353 = vunpack.c.l.b16 %v314
        %v354 = vpack.c.b16 %v339, %v338
        %v355 = vpack.c.b16 %v341, %v340
        %v356 = vpack.c.b16 %v343, %v342
        %v357 = vpack.c.b16 %v345, %v344
        %v358 = vpack.c.b16 %v347, %v346
        %v359 = vpack.c.b16 %v349, %v348
        %v360 = vpack.c.b16 %v351, %v350
        %v361 = vpack.c.b16 %v353, %v352
        %370 = vmatprep.subr.bf16.mxu0 0
        %371 = vmatpush1.bf16.msra.mxu0 %v361
        %372 = vmatprep.subr.bf16.mxu0 0
        %373 = vmatpush1.bf16.msra.mxu0 %v360
        %374 = vmatprep.subr.bf16.mxu0 0
        %375 = vmatpush1.bf16.msra.mxu0 %v359
        %376 = vmatprep.subr.bf16.mxu0 0
        %377 = vmatpush1.bf16.msra.mxu0 %v358
        %378 = vmatprep.subr.bf16.mxu0 0
        %379 = vmatpush1.bf16.msra.mxu0 %v357
        %380 = vmatprep.subr.bf16.mxu0 0
        %381 = vmatpush1.bf16.msra.mxu0 %v356
        %382 = vmatprep.subr.bf16.mxu0 0
        %383 = vmatpush1.bf16.msra.mxu0 %v355
        %384 = vmatprep.subr.bf16.mxu0 0
        %385 = vmatpush1.bf16.msra.mxu0 %v354
        %386 = vmatprep.subr.bf16.mxu0 0
        %387 = vmatpush2.bf16.msra.mxu0 0
        %388 = vmatprep.subr.bf16.mxu0 0
        %389 = vmatpush2.bf16.msra.mxu0 0
        %390 = vmatprep.subr.bf16.mxu0 0
        %391 = vmatpush2.bf16.msra.mxu0 0
        %392 = vmatprep.subr.bf16.mxu0 0
        %393 = vmatpush2.bf16.msra.mxu0 0
        %394 = vmatprep.subr.bf16.mxu0 0
        %395 = vmatpush2.bf16.msra.mxu0 0
        %396 = vmatprep.subr.bf16.mxu0 0
        %397 = vmatpush2.bf16.msra.mxu0 0
        %398 = vmatprep.subr.bf16.mxu0 0
        %399 = vmatpush2.bf16.msra.mxu0 0
        %400 = vmatprep.subr.bf16.mxu0 0
        %401 = vmatpush2.bf16.msra.mxu0 0
        %402 = vmatprep.mubr.bf16.mxu0 0
        %403 = vmatmul.mubr.bf16.gmra.mxu0 %v298
        %v404 = vpop.f32.mrf.mxu0
        %v405 = vadd.f32 %v320, %v404
        %v406 = vpop.f32.mrf.mxu0
        %v407 = vpop.f32.mrf.mxu0
        %v408 = vpop.f32.mrf.mxu0
        %409 = vdwg.mxu0
        %v410 = vmul.f32 %v405, %v405
        %v411 = vmul.f32 %v405, %v410
        %v412 = vmul.f32 %v411, 0.044715
        %v413 = vadd.f32 %v405, %v412
        %v414 = vmul.f32 %v413, 0.7978846
        %v415 = vtanh.pop %v414
        %v416 = vadd.f32 %v415, 1.0
        %v417 = vmul.f32 %v416, 0.5
        %v418 = vmul.f32 %v405, %v417
        %v419 = vld [vmem:[#allocation2] sm:$0xff]
        %v420 = vpack.c.bf16 %v418, %v418
        %v421 = vld [vmem:[#allocation5] sm:$0xf]
        %v422 = vld [vmem:[#allocation5 + $0x4] sm:$0xf]
        %v423 = vld [vmem:[#allocation5 + $0x8] sm:$0xf]
        %v424 = vld [vmem:[#allocation5 + $0xc] sm:$0xf]
        %v425 = vld [vmem:[#allocation5 + $0x10] sm:$0xf]
        %v426 = vld [vmem:[#allocation5 + $0x14] sm:$0xf]
        %v427 = vld [vmem:[#allocation5 + $0x18] sm:$0xf]
        %v428 = vld [vmem:[#allocation5 + $0x1c] sm:$0xf]
        %v429 = vld [vmem:[#allocation5 + $0x20] sm:$0xf]
        %v430 = vld [vmem:[#allocation5 + $0x24] sm:$0xf]
        %v431 = vld [vmem:[#allocation5 + $0x28] sm:$0xf]
        %v432 = vld [vmem:[#allocation5 + $0x2c] sm:$0xf]
        %v433 = vld [vmem:[#allocation5 + $0x30] sm:$0xf]
        %v434 = vld [vmem:[#allocation5 + $0x34] sm:$0xf]
        %v435 = vld [vmem:[#allocation5 + $0x38] sm:$0xf]
        %v436 = vld [vmem:[#allocation5 + $0x3c] sm:$0xf]
        %v453 = vunpack.c.l.b16 %v421
        %v454 = vunpack.c.l.b16 %v422
        %v455 = vunpack.c.l.b16 %v423
        %v456 = vunpack.c.l.b16 %v424
        %v457 = vunpack.c.l.b16 %v425
        %v458 = vunpack.c.l.b16 %v426
        %v459 = vunpack.c.l.b16 %v427
        %v460 = vunpack.c.l.b16 %v428
        %v461 = vunpack.c.l.b16 %v429
        %v462 = vunpack.c.l.b16 %v430
        %v463 = vunpack.c.l.b16 %v431
        %v464 = vunpack.c.l.b16 %v432
        %v465 = vunpack.c.l.b16 %v433
        %v466 = vunpack.c.l.b16 %v434
        %v467 = vunpack.c.l.b16 %v435
        %v468 = vunpack.c.l.b16 %v436
        %v469 = vpack.c.b16 %v454, %v453
        %v470 = vpack.c.b16 %v456, %v455
        %v471 = vpack.c.b16 %v458, %v457
        %v472 = vpack.c.b16 %v460, %v459
        %v473 = vpack.c.b16 %v462, %v461
        %v474 = vpack.c.b16 %v464, %v463
        %v475 = vpack.c.b16 %v466, %v465
        %v476 = vpack.c.b16 %v468, %v467
        %485 = vmatprep.subr.bf16.mxu0 0
        %486 = vmatpush1.bf16.msra.mxu0 %v476
        %487 = vmatprep.subr.bf16.mxu0 0
        %488 = vmatpush1.bf16.msra.mxu0 %v475
        %489 = vmatprep.subr.bf16.mxu0 0
        %490 = vmatpush1.bf16.msra.mxu0 %v474
        %491 = vmatprep.subr.bf16.mxu0 0
        %492 = vmatpush1.bf16.msra.mxu0 %v473
        %493 = vmatprep.subr.bf16.mxu0 0
        %494 = vmatpush1.bf16.msra.mxu0 %v472
        %495 = vmatprep.subr.bf16.mxu0 0
        %496 = vmatpush1.bf16.msra.mxu0 %v471
        %497 = vmatprep.subr.bf16.mxu0 0
        %498 = vmatpush1.bf16.msra.mxu0 %v470
        %499 = vmatprep.subr.bf16.mxu0 0
        %500 = vmatpush1.bf16.msra.mxu0 %v469
        %501 = vmatprep.subr.bf16.mxu0 0
        %502 = vmatpush2.bf16.msra.mxu0 0
        %503 = vmatprep.subr.bf16.mxu0 0
        %504 = vmatpush2.bf16.msra.mxu0 0
        %505 = vmatprep.subr.bf16.mxu0 0
        %506 = vmatpush2.bf16.msra.mxu0 0
        %507 = vmatprep.subr.bf16.mxu0 0
        %508 = vmatpush2.bf16.msra.mxu0 0
        %509 = vmatprep.subr.bf16.mxu0 0
        %510 = vmatpush2.bf16.msra.mxu0 0
        %511 = vmatprep.subr.bf16.mxu0 0
        %512 = vmatpush2.bf16.msra.mxu0 0
        %513 = vmatprep.subr.bf16.mxu0 0
        %514 = vmatpush2.bf16.msra.mxu0 0
        %515 = vmatprep.subr.bf16.mxu0 0
        %516 = vmatpush2.bf16.msra.mxu0 0
        %517 = vmatprep.mubr.bf16.mxu0 0
        %518 = vmatmul.mubr.bf16.gmra.mxu0 %v420
        %v519 = vpop.f32.mrf.mxu0
        %v520 = vadd.f32 0.0, %v519
        %v521 = vpop.f32.mrf.mxu0
        %v522 = vpop.f32.mrf.mxu0
        %v523 = vpop.f32.mrf.mxu0
        %524 = vdwg.mxu0
        %v525 = vadd.f32 %v419, %v520
        %526 = vst [vmem:[#allocation2] sm:$0xff] %v525
        // Predicated region
        $region53: #{feed_forward_padded.1} parent=39 // pred_check
          %p527 = pneg %p293
        $region54: #{feed_forward_padded.1} parent=39 // pred_check_branch
          %529 = sbr.rel (%p527) target = $region56
        $region55: #{feed_forward_padded.1} parent=39 // pred_region
          %v530 = vld [vmem:[#allocation2] sm:$0xff]
          %v531 = vld [vmem:[%s4] sm:$0x1]
          %v533 = vlaneseq
          %v534 = vshrl.u32 %v533, 7
          %v535 = vsub.s32 0, %v534
          %v536 = vrot.slane %v531, %v535
          %v538 = vadd.f32 %v530, %v536
          %539 = vst [vmem:[%s291] sm:$0xff] %v538
        $region56: #{feed_forward_padded.1} parent=39 // pred_fallthru
          _
        %p540 = scmp.lt.s32.totalorder %s22, 1
        %s541 = scalar_select %p540, %s22, 1
        %s542 = smul.addr %s541, 8
        %s543 = scalar_lea.vmem %s5, %s542
        // Predicated region
        $region57: #{feed_forward_padded.1} parent=39 // pred_check
          %p544 = pneg %p173
        $region58: #{feed_forward_padded.1} parent=39 // pred_check_branch
          %546 = sbr.rel (%p544) target = $region60
        $region59: #{feed_forward_padded.1} parent=39 // pred_region
          _
        $region60: #{feed_forward_padded.1} parent=39 // pred_fallthru
          _
      $region40: #{feed_forward_padded.1} parent=5 // pred_fallthru
        _
      %p547 = scmp.le.s32.totalorder 2, %s13
      // Predicated region
      $region61: #{feed_forward_padded.1} parent=5 // pred_check
        %p548 = pneg %p547
      $region62: #{feed_forward_padded.1} parent=5 // pred_check_branch
        %550 = sbr.rel (%p548) target = $region64
      $region63: #{feed_forward_padded.1} parent=5 // pred_region
        %s551 = ssub.s32 %s13, 2
        // Predicated region
        $region65: #{feed_forward_padded.1} parent=63 // pred_check
          %p552 = pneg %p179
        $region66: #{feed_forward_padded.1} parent=63 // pred_check_branch
          %554 = sbr.rel (%p552) target = $region68
        $region67: #{feed_forward_padded.1} parent=63 // pred_region
          %p555 = scmp.lt.s32.totalorder %s24, 1
          %s556 = scalar_select %p555, %s24, 1
          %s557 = smul.addr %s556, 8
          %s558 = scalar_lea.vmem %s5, %s557
        $region68: #{feed_forward_padded.1} parent=63 // pred_fallthru
          _
      $region64: #{feed_forward_padded.1} parent=5 // pred_fallthru
        _
    $region6: #{feed_forward_padded.1} parent=1 // loop_footer
      %s17 = sadd.s32 1, %s13
    $region7: #{feed_forward_padded.1} parent=1 // loop_footer_branch
      %12 = sbr.rel target = $region3
    $region8: #{feed_forward_padded.1} parent=1 // loop_exit
      _
    %559 = vsyncpa [#allocation4], 1
    %s560 = scalar_lea.sflag [#allocation4], 1
    %561 = vsyncpa %s560, 1
    %562 = vsyncpa [#allocation6], 1

</llo_original>
